<compile_context>
chip_gen: v6e
topology: v6e:2x2x1
jax: 0.10.0
libtpu: 0.0.40
codegen_flags: <defaults>
</compile_context>

<pallas_src>
import functools

import jax
import jax.numpy as jnp
from jax.experimental import pallas as pl
from jax.experimental.pallas import tpu as pltpu


def _round_up(x, m):
    return (x + m - 1) // m * m


def actor_critic_kernel(
    x_ref,
    w_in_ref, b_in_ref,
    w_ac1_ref, b_ac1_ref,
    w2_ref, b2_ref,
    out_ref,
    *, output_dim,
):
    cdt = w_in_ref.dtype                      # matmul input dtype (f32 or bf16)
    x = x_ref[...].astype(cdt)

    # shared trunk: Linear + ReLU  (f32 accumulation, f32 bias/relu)
    h = jnp.dot(x, w_in_ref[...], preferred_element_type=jnp.float32) + b_in_ref[...]
    h = jnp.maximum(h, 0.0)

    # fused actor-1 || critic-1: one (TB,H) @ (H,2H) matmul, then ReLU
    ac = jnp.dot(h.astype(cdt), w_ac1_ref[...],
                 preferred_element_type=jnp.float32) + b_ac1_ref[...]
    ac = jnp.maximum(ac, 0.0)

    # fused block-diagonal head-2: (TB,2H) @ (2H,128) -> lane-dense result
    #   lanes [0:output_dim]  = actor logits
    #   lane  [output_dim]    = critic value
    #   lanes beyond          = exact zeros (zero weight / zero bias padding)
    z = jnp.dot(ac.astype(cdt), w2_ref[...],
                preferred_element_type=jnp.float32) + b2_ref[...]

    # log-softmax over the real logit lanes only (mask the padded lanes)
    lane = jax.lax.broadcasted_iota(jnp.int32, z.shape, 1)
    is_logit = lane < output_dim
    masked = jnp.where(is_logit, z, -jnp.inf)
    m = jnp.max(masked, axis=-1, keepdims=True)
    lse = jnp.log(jnp.sum(jnp.exp(masked - m), axis=-1, keepdims=True)) + m

    # subtract lse from logit lanes only; value lane and padding pass through
    out_ref[...] = (z - jnp.where(is_logit, lse, 0.0)).astype(out_ref.dtype)


def fuse_params(p, compute_dtype=jnp.float32, out_pad=128):
    """Pre-fuse actor/critic weights into MXU-friendly, lane-dense shapes."""
    n_hidden = p["w_in"].shape[1]
    output_dim = p["w_a2"].shape[1]

    w_ac1 = jnp.concatenate([p["w_a1"], p["w_c1"]], axis=1)          # (H, 2H)
    b_ac1 = jnp.concatenate([p["b_a1"], p["b_c1"]], axis=1)          # (1, 2H)

    w2 = jnp.zeros((2 * n_hidden, out_pad), jnp.float32)             # block-diag
    w2 = w2.at[:n_hidden, :output_dim].set(p["w_a2"])
    w2 = w2.at[n_hidden:, output_dim:output_dim + 1].set(p["w_c2"])
    b2 = jnp.zeros((1, out_pad), jnp.float32)
    b2 = b2.at[:, :output_dim].set(p["b_a2"])
    b2 = b2.at[:, output_dim:output_dim + 1].set(p["b_c2"])

    return dict(
        w_in=p["w_in"].astype(compute_dtype),
        b_in=p["b_in"].astype(jnp.float32),
        w_ac1=w_ac1.astype(compute_dtype),
        b_ac1=b_ac1.astype(jnp.float32),
        w2=w2.astype(compute_dtype),
        b2=b2,
        output_dim=output_dim,
        out_pad=out_pad,
        n_hidden=n_hidden,
    )


def actor_critic_forward(x, fp, *, block_b=512):
    B, in_dim = x.shape
    out_pad = fp["out_pad"]
    output_dim = fp["output_dim"]
    n_hidden = fp["n_hidden"]

    # batch tile: multiple of 8 rows (f32 sublane); pad B up to a full tile
    TB = min(block_b, _round_up(B, 8))
    Bp = _round_up(B, TB)
    if Bp != B:
        x = jnp.pad(x, ((0, Bp - B), (0, 0)))
    grid = (Bp // TB,)

    def const_spec(arr):
        return pl.BlockSpec(arr.shape, lambda i: (0, 0))  # VMEM-resident weight

    flops = 2 * Bp * (in_dim * n_hidden
                      + n_hidden * 2 * n_hidden
                      + 2 * n_hidden * out_pad)
    weight_bytes = sum(int(fp[k].size) * fp[k].dtype.itemsize
                       for k in ("w_in", "b_in", "w_ac1", "b_ac1", "w2", "b2"))
    bytes_accessed = int(x.size) * x.dtype.itemsize + weight_bytes + Bp * out_pad * 4

    kernel = functools.partial(actor_critic_kernel, output_dim=output_dim)
    out = pl.pallas_call(
        kernel,
        grid=grid,
        in_specs=[
            pl.BlockSpec((TB, in_dim), lambda i: (i, 0)),
            const_spec(fp["w_in"]), const_spec(fp["b_in"]),
            const_spec(fp["w_ac1"]), const_spec(fp["b_ac1"]),
            const_spec(fp["w2"]), const_spec(fp["b2"]),
        ],
        out_specs=pl.BlockSpec((TB, out_pad), lambda i: (i, 0)),
        out_shape=jax.ShapeDtypeStruct((Bp, out_pad), jnp.float32),
        compiler_params=pltpu.CompilerParams(
            dimension_semantics=("parallel",),   # shard batch tiles across TCs (v7x)
        ),
        cost_estimate=pl.CostEstimate(
            flops=flops,
            transcendentals=Bp * (out_pad + 1),
            bytes_accessed=bytes_accessed,
        ),
    )(x, fp["w_in"], fp["b_in"], fp["w_ac1"], fp["b_ac1"], fp["w2"], fp["b2"])

    logp = out[:B, :output_dim]
    value = out[:B, output_dim:output_dim + 1]
    return logp, value


def init_params(key, input_dim, output_dim, n_hidden=128):
    """PyTorch-style uniform(-1/sqrt(fan_in), 1/sqrt(fan_in)) init, deterministic."""
    def linear(key, fan_in, fan_out):
        kw, kb = jax.random.split(key)
        bound = 1.0 / jnp.sqrt(jnp.float32(fan_in))
        w = jax.random.uniform(kw, (fan_in, fan_out), jnp.float32, -bound, bound)
        b = jax.random.uniform(kb, (1, fan_out), jnp.float32, -bound, bound)
        return w, b

    k0, k1, k2, k3, k4 = jax.random.split(key, 5)
    w_in, b_in = linear(k0, input_dim, n_hidden)
    w_a1, b_a1 = linear(k1, n_hidden, n_hidden)
    w_a2, b_a2 = linear(k2, n_hidden, output_dim)
    w_c1, b_c1 = linear(k3, n_hidden, n_hidden)
    w_c2, b_c2 = linear(k4, n_hidden, 1)
    return dict(
        w_in=w_in, b_in=b_in,
        w_a1=w_a1, b_a1=b_a1,
        w_a2=w_a2, b_a2=b_a2,
        w_c1=w_c1, b_c1=b_c1,
        w_c2=w_c2, b_c2=b_c2,
    )


def reference_forward(x, p):
    dot = lambda a, b: jnp.dot(a, b, precision=jax.lax.Precision.HIGHEST)
    h = jnp.maximum(dot(x, p["w_in"]) + p["b_in"], 0.0)
    a = jnp.maximum(dot(h, p["w_a1"]) + p["b_a1"], 0.0)
    logits = dot(a, p["w_a2"]) + p["b_a2"]
    logp = jax.nn.log_softmax(logits, axis=-1)
    c = jnp.maximum(dot(h, p["w_c1"]) + p["b_c1"], 0.0)
    value = dot(c, p["w_c2"]) + p["b_c2"]
    return logp, value


if __name__ == "__main__":
    input_dim, output_dim, n_hidden = 8, 4, 128   # LunarLander-v2 dims
    batch = 64                                    # small demo batch

    key = jax.random.PRNGKey(0)
    kx, kp = jax.random.split(key)
    x = jax.random.normal(kx, (batch, input_dim), dtype=jnp.float32)
    params = init_params(kp, input_dim, output_dim, n_hidden)
    ref_logp, ref_value = reference_forward(x, params)

    # f32 path, batch tiled into grid=(4,) so weights stay VMEM-resident
    fused_f32 = fuse_params(params, jnp.float32)
    logp, value = actor_critic_forward(x, fused_f32, block_b=16)
    jax.block_until_ready((logp, value))
    assert logp.shape == (batch, output_dim)
    assert value.shape == (batch, 1)
    assert jnp.allclose(logp, ref_logp, atol=1e-4, rtol=1e-4)
    assert jnp.allclose(value, ref_value, atol=1e-4, rtol=1e-4)

    # bf16 matmul path (f32 accumulation) for rollout-scale throughput
    fused_bf16 = fuse_params(params, jnp.bfloat16)
    logp_bf, value_bf = actor_critic_forward(x, fused_bf16, block_b=64)
    jax.block_until_ready((logp_bf, value_bf))
    assert jnp.allclose(logp_bf, ref_logp, atol=1e-1, rtol=1e-1)
    assert jnp.allclose(value_bf, ref_value, atol=1e-1, rtol=1e-1)

    print("KERNEL_OK")
</pallas_src>

<mosaic_0001>
module attributes {stable_mosaic.version = 11 : i64} {
  func.func @actor_critic_kernel(%arg0: i32, %arg1: memref<16x8xf32, #tpu.memory_space<vmem>>, %arg2: memref<8x128xf32, #tpu.memory_space<vmem>>, %arg3: memref<1x128xf32, #tpu.memory_space<vmem>>, %arg4: memref<128x256xf32, #tpu.memory_space<vmem>>, %arg5: memref<1x256xf32, #tpu.memory_space<vmem>>, %arg6: memref<256x128xf32, #tpu.memory_space<vmem>>, %arg7: memref<1x128xf32, #tpu.memory_space<vmem>>, %arg8: memref<16x128xf32, #tpu.memory_space<vmem>>) attributes {dimension_semantics = [#tpu.dimension_semantics<parallel>], iteration_bounds = array<i64: 4>, scalar_prefetch = 0 : i64, scratch_operands = 0 : i64, tpu.core_type = #tpu.core_type<tc>, window_params = [{transform_indices = @transform_0, window_bounds = array<i64: 16, 8>}, {pipeline_mode = #tpu.pipeline_mode<synchronous>, transform_indices = @transform_1, window_bounds = array<i64: 8, 128>}, {pipeline_mode = #tpu.pipeline_mode<synchronous>, transform_indices = @transform_2, window_bounds = array<i64: 1, 128>}, {pipeline_mode = #tpu.pipeline_mode<synchronous>, transform_indices = @transform_3, window_bounds = array<i64: 128, 256>}, {pipeline_mode = #tpu.pipeline_mode<synchronous>, transform_indices = @transform_4, window_bounds = array<i64: 1, 256>}, {pipeline_mode = #tpu.pipeline_mode<synchronous>, transform_indices = @transform_5, window_bounds = array<i64: 256, 128>}, {pipeline_mode = #tpu.pipeline_mode<synchronous>, transform_indices = @transform_6, window_bounds = array<i64: 1, 128>}, {transform_indices = @transform_7, window_bounds = array<i64: 16, 128>}]} {
    %c0 = arith.constant 0 : index
    %c0_0 = arith.constant 0 : index
    %0 = vector.load %arg1[%c0, %c0_0] : memref<16x8xf32, #tpu.memory_space<vmem>>, vector<16x8xf32>
    %c0_1 = arith.constant 0 : index
    %c0_2 = arith.constant 0 : index
    %1 = vector.load %arg2[%c0_1, %c0_2] : memref<8x128xf32, #tpu.memory_space<vmem>>, vector<8x128xf32>
    %cst = arith.constant dense<0.000000e+00> : vector<16x128xf32>
    %2 = tpu.matmul %0, %1, %cst {dimension_numbers = #tpu.dot_dimension_numbers<[1], [0], [0], [1], [0, 0, 1, 1], [], []>} : vector<16x8xf32>, vector<8x128xf32>, vector<16x128xf32> -> vector<16x128xf32>
    %c0_3 = arith.constant 0 : index
    %c0_4 = arith.constant 0 : index
    %3 = vector.load %arg3[%c0_3, %c0_4] : memref<1x128xf32, #tpu.memory_space<vmem>>, vector<1x128xf32>
    %4 = vector.broadcast %3 : vector<1x128xf32> to vector<16x128xf32>
    %5 = arith.addf %2, %4 : vector<16x128xf32>
    %cst_5 = arith.constant 0.000000e+00 : f32
    %6 = vector.broadcast %cst_5 : f32 to vector<16x128xf32>
    %7 = arith.maximumf %5, %6 : vector<16x128xf32>
    %c0_6 = arith.constant 0 : index
    %c0_7 = arith.constant 0 : index
    %8 = vector.load %arg4[%c0_6, %c0_7] : memref<128x256xf32, #tpu.memory_space<vmem>>, vector<128x256xf32>
    %cst_8 = arith.constant dense<0.000000e+00> : vector<16x256xf32>
    %9 = tpu.matmul %7, %8, %cst_8 {dimension_numbers = #tpu.dot_dimension_numbers<[1], [0], [0], [1], [0, 0, 1, 1], [], []>} : vector<16x128xf32>, vector<128x256xf32>, vector<16x256xf32> -> vector<16x256xf32>
    %c0_9 = arith.constant 0 : index
    %c0_10 = arith.constant 0 : index
    %10 = vector.load %arg5[%c0_9, %c0_10] : memref<1x256xf32, #tpu.memory_space<vmem>>, vector<1x256xf32>
    %11 = vector.broadcast %10 : vector<1x256xf32> to vector<16x256xf32>
    %12 = arith.addf %9, %11 : vector<16x256xf32>
    %cst_11 = arith.constant 0.000000e+00 : f32
    %13 = vector.broadcast %cst_11 : f32 to vector<16x256xf32>
    %14 = arith.maximumf %12, %13 : vector<16x256xf32>
    %c0_12 = arith.constant 0 : index
    %c0_13 = arith.constant 0 : index
    %15 = vector.load %arg6[%c0_12, %c0_13] : memref<256x128xf32, #tpu.memory_space<vmem>>, vector<256x128xf32>
    %cst_14 = arith.constant dense<0.000000e+00> : vector<16x128xf32>
    %16 = tpu.matmul %14, %15, %cst_14 {dimension_numbers = #tpu.dot_dimension_numbers<[1], [0], [0], [1], [0, 0, 1, 1], [], []>} : vector<16x256xf32>, vector<256x128xf32>, vector<16x128xf32> -> vector<16x128xf32>
    %c0_15 = arith.constant 0 : index
    %c0_16 = arith.constant 0 : index
    %17 = vector.load %arg7[%c0_15, %c0_16] : memref<1x128xf32, #tpu.memory_space<vmem>>, vector<1x128xf32>
    %18 = vector.broadcast %17 : vector<1x128xf32> to vector<16x128xf32>
    %19 = arith.addf %16, %18 : vector<16x128xf32>
    %20 = tpu.iota {dimensions = array<i32: 1>} : vector<16x128xi32>
    %c4_i32 = arith.constant 4 : i32
    %21 = vector.broadcast %c4_i32 : i32 to vector<16x128xi32>
    %22 = arith.cmpi slt, %20, %21 : vector<16x128xi32>
    %cst_17 = arith.constant 0xFF800000 : f32
    %23 = vector.broadcast %cst_17 : f32 to vector<16x128xf32>
    %24 = arith.select %22, %19, %23 : vector<16x128xi1>, vector<16x128xf32>
    %cst_18 = arith.constant dense<0xFF800000> : vector<16xf32>
    %25 = vector.multi_reduction <maximumf>, %24, %cst_18 [1] : vector<16x128xf32> to vector<16xf32>
    %26 = vector.shape_cast %25 : vector<16xf32> to vector<16x1xf32>
    %27 = vector.broadcast %26 : vector<16x1xf32> to vector<16x128xf32>
    %28 = arith.subf %24, %27 : vector<16x128xf32>
    %29 = math.exp %28 : vector<16x128xf32>
    %cst_19 = arith.constant dense<0.000000e+00> : vector<16xf32>
    %30 = vector.multi_reduction <add>, %29, %cst_19 [1] : vector<16x128xf32> to vector<16xf32>
    %31 = vector.shape_cast %30 : vector<16xf32> to vector<16x1xf32>
    %32 = math.log %31 : vector<16x1xf32>
    %33 = arith.addf %32, %26 : vector<16x1xf32>
    %cst_20 = arith.constant 0.000000e+00 : f32
    %34 = vector.shape_cast %33 : vector<16x1xf32> to vector<16x1xf32>
    %35 = vector.broadcast %34 : vector<16x1xf32> to vector<16x128xf32>
    %36 = vector.broadcast %cst_20 : f32 to vector<16x128xf32>
    %37 = arith.select %22, %35, %36 : vector<16x128xi1>, vector<16x128xf32>
    %38 = arith.subf %19, %37 : vector<16x128xf32>
    %c0_21 = arith.constant 0 : index
    %c0_22 = arith.constant 0 : index
    %39 = vector.load %arg8[%c0_21, %c0_22] : memref<16x128xf32, #tpu.memory_space<vmem>>, vector<16x128xf32>
    tpu.vector_store %arg8[%c0_21, %c0_22], %38 {strides = array<i32>} : memref<16x128xf32, #tpu.memory_space<vmem>>, vector<16x128xf32>,
    return
  }
  func.func @transform_0(%arg0: i32) -> (i32, i32) {
    %c0_i32 = arith.constant 0 : i32
    %c0_i32_0 = arith.constant 0 : i32
    return %arg0, %c0_i32 : i32, i32
  }
  func.func @transform_1(%arg0: i32) -> (i32, i32) {
    %c0_i32 = arith.constant 0 : i32
    %c0_i32_0 = arith.constant 0 : i32
    %c0_i32_1 = arith.constant 0 : i32
    return %c0_i32, %c0_i32_0 : i32, i32
  }
  func.func @transform_2(%arg0: i32) -> (i32, i32) {
    %c0_i32 = arith.constant 0 : i32
    %c0_i32_0 = arith.constant 0 : i32
    %c0_i32_1 = arith.constant 0 : i32
    return %c0_i32, %c0_i32_0 : i32, i32
  }
  func.func @transform_3(%arg0: i32) -> (i32, i32) {
    %c0_i32 = arith.constant 0 : i32
    %c0_i32_0 = arith.constant 0 : i32
    %c0_i32_1 = arith.constant 0 : i32
    return %c0_i32, %c0_i32_0 : i32, i32
  }
  func.func @transform_4(%arg0: i32) -> (i32, i32) {
    %c0_i32 = arith.constant 0 : i32
    %c0_i32_0 = arith.constant 0 : i32
    %c0_i32_1 = arith.constant 0 : i32
    return %c0_i32, %c0_i32_0 : i32, i32
  }
  func.func @transform_5(%arg0: i32) -> (i32, i32) {
    %c0_i32 = arith.constant 0 : i32
    %c0_i32_0 = arith.constant 0 : i32
    %c0_i32_1 = arith.constant 0 : i32
    return %c0_i32, %c0_i32_0 : i32, i32
  }
  func.func @transform_6(%arg0: i32) -> (i32, i32) {
    %c0_i32 = arith.constant 0 : i32
    %c0_i32_0 = arith.constant 0 : i32
    %c0_i32_1 = arith.constant 0 : i32
    return %c0_i32, %c0_i32_0 : i32, i32
  }
  func.func @transform_7(%arg0: i32) -> (i32, i32) {
    %c0_i32 = arith.constant 0 : i32
    %c0_i32_0 = arith.constant 0 : i32
    return %arg0, %c0_i32 : i32, i32
  }
}

</mosaic_0001>

<llo_original>
// kernel: tpu_custom_call.1
$region0: #{tpu_custom_call.1}
  #allocation0 [shape = 'u32[]', space=smem, size = 0x4, offset = 0x4, fixed_abs, tag = 'smem constant byte address 0x4 - core index']
  #allocation1 [shape = 'u32[144,128]{1,0:T(1,128)}', space=vmem, size = 0x12000, scoped, tag = 'internal scratch']
  %s0 = inlined_call_operand.vmem [shape: f32[64,8], index: 0, kind: input, shape index: {}]
  %s1 = inlined_call_operand.vmem [shape: f32[8,128], index: 1, kind: input, shape index: {}]
  %s2 = inlined_call_operand.vmem [shape: f32[1,128], index: 2, kind: input, shape index: {}]
  %s3 = inlined_call_operand.hbm [shape: f32[128,256], index: 3, kind: input, shape index: {}]
  %s4 = inlined_call_operand.vmem [shape: f32[1,256], index: 4, kind: input, shape index: {}]
  %s5 = inlined_call_operand.hbm [shape: f32[256,128], index: 5, kind: input, shape index: {}]
  %s6 = inlined_call_operand.vmem [shape: f32[1,128], index: 6, kind: input, shape index: {}]
  %s7 = inlined_call_operand.hbm [shape: f32[64,128], index: 7, kind: output, shape index: {}]
  %s8 = sld [smem:[#allocation0]]
  $region69: #{tpu_custom_call.1} parent=0
    _
  %s10 = ssub.s32 1, %s8
  %s11 = scalar_select 0, %s10, %s8
  $region1: #{tpu_custom_call.1} parent=0
    #allocation2 [shape = 'u8[131072]{0}', space=vmem, size = 0x20000, scoped, tag = 'input window, operand 3, single buffered']
    #allocation3 [shape = 's32[2]{0}', space=sflag, size = 0x8, scoped, tag = 'scoped memory for tpu_custom_call.1']
    #allocation4 [shape = 's32[2]{0}', space=sflag, size = 0x8, scoped, tag = 'scoped memory for tpu_custom_call.1']
    #allocation5 [shape = 'u8[131072]{0}', space=vmem, size = 0x20000, scoped, tag = 'input window, operand 5, single buffered']
    #allocation6 [shape = 's32[1]{0}', space=sflag, size = 0x4, scoped, tag = 'scoped memory for tpu_custom_call.1']
    #allocation7 [shape = 'u8[16384]{0}', space=vmem, size = 0x4000, scoped, tag = 'output window, operand 0']
    %12 = vsyncpa [#allocation3], 0
    %13 = vsyncpa [#allocation6], 0
    %14 = vsyncpa [#allocation4], 0
    %s15 = scalar_lea.sflag [#allocation4], 1
    %16 = vsyncpa %s15, 0
    loop: start=0, step=1, limit=6
    $region2: #{tpu_custom_call.1} parent=1 // loop_pre_header
      _
    $region3: #{tpu_custom_call.1} parent=1 // loop_header
      %s18 = sphi 0, %s22
      %p19 = scmp.ge.s32.totalorder %s18, 6
      %s28 = sphi 0, %s30
      %s31 = sphi 0, %s28
      %s32 = sphi 0, %s31
      %s48 = sphi 0, %s32
      %s52 = sphi 0, %s52
      %s54 = sphi 0, %s52
      %s55 = sphi 0, %s54
      %s69 = sphi 0, %s55
      %s73 = sphi 0, %s73
      %s75 = sphi 0, %s73
      %s76 = sphi 0, %s75
      %s90 = sphi 0, %s76
      %s94 = sphi 0, %s94
      %s96 = sphi 0, %s94
      %s97 = sphi 0, %s96
      %s111 = sphi 0, %s97
      %s115 = sphi 0, %s115
      %s117 = sphi 0, %s115
      %s118 = sphi 0, %s117
      %s132 = sphi 0, %s118
      %s136 = sphi 0, %s136
      %s138 = sphi 0, %s136
      %s139 = sphi 0, %s138
      %s153 = sphi 0, %s139
      %s157 = sphi 0, %s157
      %s159 = sphi 0, %s157
      %s160 = sphi 0, %s159
      %s174 = sphi 0, %s160
      %s180 = sphi 0, %s182
      %s183 = sphi 0, %s180
      %s184 = sphi 0, %s183
      %s200 = sphi 0, %s184
    $region4: #{tpu_custom_call.1} parent=1 // loop_header_branch
      %21 = sbr.rel (%p19) target = $region8
    $region5: #{tpu_custom_call.1} parent=1 // loop_body
      %s23 = ssub.s32 %s18, 1
      %s24 = ssub.s32 %s18, 2
      %s25 = sadd.s32 %s18, 1
      %s26 = ssub.s32 %s18, %s25
      %p27 = scmp.eq.s32.totalorder %s26, 0
      %s29 = sadd.s32 %s28, 1
      %s30 = scalar_select %p27, %s28, %s29
      %p33 = pneg %p27
      %p34 = scmp.eq.s32.totalorder %s18, 3
      %p35 = por %p33, %p34
      %p36 = scmp.ne.s32.totalorder %s28, %s31
      %p37 = scmp.eq.s32.totalorder %s18, 0
      %p38 = por %p36, %p37
      %p39 = scmp.ne.s32.totalorder %s28, %s31
      %p40 = scmp.eq.s32.totalorder %s23, 3
      %p41 = por %p39, %p40
      %p42 = scmp.ne.s32.totalorder %s31, %s32
      %p43 = scmp.eq.s32.totalorder %s23, 0
      %p44 = por %p42, %p43
      %p45 = scmp.ne.s32.totalorder %s31, %s32
      %p46 = scmp.eq.s32.totalorder %s24, 3
      %p47 = por %p45, %p46
      %p49 = scmp.ne.s32.totalorder %s32, %s48
      %p50 = scmp.eq.s32.totalorder %s24, 0
      %p51 = por %p49, %p50
      %s53 = sadd.s32 %s52, 1
      %p56 = scmp.eq.s32.totalorder %s18, 3
      %p57 = scmp.ne.s32.totalorder %s52, %s54
      %p58 = scmp.eq.s32.totalorder %s18, 0
      %p59 = por %p57, %p58
      %p60 = scmp.ne.s32.totalorder %s52, %s54
      %p61 = scmp.eq.s32.totalorder %s23, 3
      %p62 = por %p60, %p61
      %p63 = scmp.ne.s32.totalorder %s54, %s55
      %p64 = scmp.eq.s32.totalorder %s23, 0
      %p65 = por %p63, %p64
      %p66 = scmp.ne.s32.totalorder %s54, %s55
      %p67 = scmp.eq.s32.totalorder %s24, 3
      %p68 = por %p66, %p67
      %p70 = scmp.ne.s32.totalorder %s55, %s69
      %p71 = scmp.eq.s32.totalorder %s24, 0
      %p72 = por %p70, %p71
      %s74 = sadd.s32 %s73, 1
      %p77 = scmp.eq.s32.totalorder %s18, 3
      %p78 = scmp.ne.s32.totalorder %s73, %s75
      %p79 = scmp.eq.s32.totalorder %s18, 0
      %p80 = por %p78, %p79
      %p81 = scmp.ne.s32.totalorder %s73, %s75
      %p82 = scmp.eq.s32.totalorder %s23, 3
      %p83 = por %p81, %p82
      %p84 = scmp.ne.s32.totalorder %s75, %s76
      %p85 = scmp.eq.s32.totalorder %s23, 0
      %p86 = por %p84, %p85
      %p87 = scmp.ne.s32.totalorder %s75, %s76
      %p88 = scmp.eq.s32.totalorder %s24, 3
      %p89 = por %p87, %p88
      %p91 = scmp.ne.s32.totalorder %s76, %s90
      %p92 = scmp.eq.s32.totalorder %s24, 0
      %p93 = por %p91, %p92
      %s95 = sadd.s32 %s94, 1
      %p98 = scmp.eq.s32.totalorder %s18, 3
      %p99 = scmp.ne.s32.totalorder %s94, %s96
      %p100 = scmp.eq.s32.totalorder %s18, 0
      %p101 = por %p99, %p100
      %p102 = scmp.ne.s32.totalorder %s94, %s96
      %p103 = scmp.eq.s32.totalorder %s23, 3
      %p104 = por %p102, %p103
      %p105 = scmp.ne.s32.totalorder %s96, %s97
      %p106 = scmp.eq.s32.totalorder %s23, 0
      %p107 = por %p105, %p106
      %p108 = scmp.ne.s32.totalorder %s96, %s97
      %p109 = scmp.eq.s32.totalorder %s24, 3
      %p110 = por %p108, %p109
      %p112 = scmp.ne.s32.totalorder %s97, %s111
      %p113 = scmp.eq.s32.totalorder %s24, 0
      %p114 = por %p112, %p113
      %s116 = sadd.s32 %s115, 1
      %p119 = scmp.eq.s32.totalorder %s18, 3
      %p120 = scmp.ne.s32.totalorder %s115, %s117
      %p121 = scmp.eq.s32.totalorder %s18, 0
      %p122 = por %p120, %p121
      %p123 = scmp.ne.s32.totalorder %s115, %s117
      %p124 = scmp.eq.s32.totalorder %s23, 3
      %p125 = por %p123, %p124
      %p126 = scmp.ne.s32.totalorder %s117, %s118
      %p127 = scmp.eq.s32.totalorder %s23, 0
      %p128 = por %p126, %p127
      %p129 = scmp.ne.s32.totalorder %s117, %s118
      %p130 = scmp.eq.s32.totalorder %s24, 3
      %p131 = por %p129, %p130
      %p133 = scmp.ne.s32.totalorder %s118, %s132
      %p134 = scmp.eq.s32.totalorder %s24, 0
      %p135 = por %p133, %p134
      %s137 = sadd.s32 %s136, 1
      %p140 = scmp.eq.s32.totalorder %s18, 3
      %p141 = scmp.ne.s32.totalorder %s136, %s138
      %p142 = scmp.eq.s32.totalorder %s18, 0
      %p143 = por %p141, %p142
      %p144 = scmp.ne.s32.totalorder %s136, %s138
      %p145 = scmp.eq.s32.totalorder %s23, 3
      %p146 = por %p144, %p145
      %p147 = scmp.ne.s32.totalorder %s138, %s139
      %p148 = scmp.eq.s32.totalorder %s23, 0
      %p149 = por %p147, %p148
      %p150 = scmp.ne.s32.totalorder %s138, %s139
      %p151 = scmp.eq.s32.totalorder %s24, 3
      %p152 = por %p150, %p151
      %p154 = scmp.ne.s32.totalorder %s139, %s153
      %p155 = scmp.eq.s32.totalorder %s24, 0
      %p156 = por %p154, %p155
      %s158 = sadd.s32 %s157, 1
      %p161 = scmp.eq.s32.totalorder %s18, 3
      %p162 = scmp.ne.s32.totalorder %s157, %s159
      %p163 = scmp.eq.s32.totalorder %s18, 0
      %p164 = por %p162, %p163
      %p165 = scmp.ne.s32.totalorder %s157, %s159
      %p166 = scmp.eq.s32.totalorder %s23, 3
      %p167 = por %p165, %p166
      %p168 = scmp.ne.s32.totalorder %s159, %s160
      %p169 = scmp.eq.s32.totalorder %s23, 0
      %p170 = por %p168, %p169
      %p171 = scmp.ne.s32.totalorder %s159, %s160
      %p172 = scmp.eq.s32.totalorder %s24, 3
      %p173 = por %p171, %p172
      %p175 = scmp.ne.s32.totalorder %s160, %s174
      %p176 = scmp.eq.s32.totalorder %s24, 0
      %p177 = por %p175, %p176
      %s178 = ssub.s32 %s18, %s25
      %p179 = scmp.eq.s32.totalorder %s178, 0
      %s181 = sadd.s32 %s180, 1
      %s182 = scalar_select %p179, %s180, %s181
      %p185 = pneg %p179
      %p186 = scmp.eq.s32.totalorder %s18, 3
      %p187 = por %p185, %p186
      %p188 = scmp.ne.s32.totalorder %s180, %s183
      %p189 = scmp.eq.s32.totalorder %s18, 0
      %p190 = por %p188, %p189
      %p191 = scmp.ne.s32.totalorder %s180, %s183
      %p192 = scmp.eq.s32.totalorder %s23, 3
      %p193 = por %p191, %p192
      %p194 = scmp.ne.s32.totalorder %s183, %s184
      %p195 = scmp.eq.s32.totalorder %s23, 0
      %p196 = por %p194, %p195
      %p197 = scmp.ne.s32.totalorder %s183, %s184
      %p198 = scmp.eq.s32.totalorder %s24, 3
      %p199 = por %p197, %p198
      %p201 = scmp.ne.s32.totalorder %s184, %s200
      %p202 = scmp.eq.s32.totalorder %s24, 0
      %p203 = por %p201, %p202
      %p204 = scmp.le.s32.totalorder 1, %s18
      %p205 = scmp.lt.s32.totalorder %s18, 5
      %p206 = pnand %p204, %p205
      %p207 = pneg %p206
      // Predicated region
      $region9: #{tpu_custom_call.1} parent=5 // pred_check
        _
      $region10: #{tpu_custom_call.1} parent=5 // pred_check_branch
        %209 = sbr.rel (%p206) target = $region12
      $region11: #{tpu_custom_call.1} parent=5 // pred_region
        %s210 = ssub.s32 %s18, 1
        // Predicated region
        $region13: #{tpu_custom_call.1} parent=11 // pred_check
          %p211 = pneg %p65
        $region14: #{tpu_custom_call.1} parent=11 // pred_check_branch
          %213 = sbr.rel (%p211) target = $region16
        $region15: #{tpu_custom_call.1} parent=11 // pred_region
          _
        $region16: #{tpu_custom_call.1} parent=11 // pred_fallthru
          _
        // Predicated region
        $region17: #{tpu_custom_call.1} parent=11 // pred_check
          %p214 = pneg %p86
        $region18: #{tpu_custom_call.1} parent=11 // pred_check_branch
          %216 = sbr.rel (%p214) target = $region20
        $region19: #{tpu_custom_call.1} parent=11 // pred_region
          _
        $region20: #{tpu_custom_call.1} parent=11 // pred_fallthru
          _
        // Predicated region
        $region21: #{tpu_custom_call.1} parent=11 // pred_check
          %p217 = pneg %p107
        $region22: #{tpu_custom_call.1} parent=11 // pred_check_branch
          %219 = sbr.rel (%p217) target = $region24
        $region23: #{tpu_custom_call.1} parent=11 // pred_region
          %s221 = ssub.s32 4096, 4096
          %222 = vsyncadd [#allocation3], %s221
          %s223 = sshll.u32 [#allocation2], 4
          %s224 = int_to_ptr.vmem [resolvable:$true] %s223
          %229 = dma.hbm_to_vmem [thread:$0]  %s3, 4096, %s224, [#allocation3], 256, 256, 16
        $region24: #{tpu_custom_call.1} parent=11 // pred_fallthru
          _
        // Predicated region
        $region25: #{tpu_custom_call.1} parent=11 // pred_check
          %p230 = pneg %p128
        $region26: #{tpu_custom_call.1} parent=11 // pred_check_branch
          %232 = sbr.rel (%p230) target = $region28
        $region27: #{tpu_custom_call.1} parent=11 // pred_region
          _
        $region28: #{tpu_custom_call.1} parent=11 // pred_fallthru
          _
        // Predicated region
        $region29: #{tpu_custom_call.1} parent=11 // pred_check
          %p233 = pneg %p149
        $region30: #{tpu_custom_call.1} parent=11 // pred_check_branch
          %235 = sbr.rel (%p233) target = $region32
        $region31: #{tpu_custom_call.1} parent=11 // pred_region
          %s237 = ssub.s32 4096, 4096
          %238 = vsyncadd [#allocation6], %s237
          %s239 = sshll.u32 [#allocation5], 4
          %s240 = int_to_ptr.vmem [resolvable:$true] %s239
          %245 = dma.hbm_to_vmem [thread:$0]  %s5, 4096, %s240, [#allocation6], 128, 128, 8
        $region32: #{tpu_custom_call.1} parent=11 // pred_fallthru
          _
        // Predicated region
        $region33: #{tpu_custom_call.1} parent=11 // pred_check
          %p246 = pneg %p170
        $region34: #{tpu_custom_call.1} parent=11 // pred_check_branch
          %248 = sbr.rel (%p246) target = $region36
        $region35: #{tpu_custom_call.1} parent=11 // pred_region
          _
        $region36: #{tpu_custom_call.1} parent=11 // pred_fallthru
          _
      $region12: #{tpu_custom_call.1} parent=5 // pred_fallthru
        _
      %p249 = scmp.lt.s32.totalorder %s18, 4
      // Predicated region
      $region37: #{tpu_custom_call.1} parent=5 // pred_check
        %p250 = pneg %p249
      $region38: #{tpu_custom_call.1} parent=5 // pred_check_branch
        %252 = sbr.rel (%p250) target = $region40
      $region39: #{tpu_custom_call.1} parent=5 // pred_region
        // Predicated region
        $region41: #{tpu_custom_call.1} parent=39 // pred_check
          %p253 = pneg %p38
        $region42: #{tpu_custom_call.1} parent=39 // pred_check_branch
          %255 = sbr.rel (%p253) target = $region44
        $region43: #{tpu_custom_call.1} parent=39 // pred_region
          %s256 = smul.u32 2, %s18
          %p257 = scmp.lt.s32.totalorder %s256, 7
          %s258 = scalar_select %p257, %s256, 7
          %s259 = smul.addr %s258, 8
          %s260 = scalar_lea.vmem %s0, %s259
          %s261 = smul.u32 2, %s18
        $region44: #{tpu_custom_call.1} parent=39 // pred_fallthru
          _
      $region40: #{tpu_custom_call.1} parent=5 // pred_fallthru
        _
      %p262 = scmp.le.s32.totalorder 1, %s18
      %p263 = scmp.lt.s32.totalorder %s18, 5
      %p264 = pnand %p262, %p263
      %p265 = pneg %p264
      // Predicated region
      $region45: #{tpu_custom_call.1} parent=5 // pred_check
        _
      $region46: #{tpu_custom_call.1} parent=5 // pred_check_branch
        %267 = sbr.rel (%p264) target = $region48
      $region47: #{tpu_custom_call.1} parent=5 // pred_region
        %s268 = ssub.s32 %s18, 1
        // Predicated region
        $region49: #{tpu_custom_call.1} parent=47 // pred_check
          %p269 = pneg %p107
        $region50: #{tpu_custom_call.1} parent=47 // pred_check_branch
          %271 = sbr.rel (%p269) target = $region52
        $region51: #{tpu_custom_call.1} parent=47 // pred_region
          %272 = dma.done [#allocation3], 4096
        $region52: #{tpu_custom_call.1} parent=47 // pred_fallthru
          _
        // Predicated region
        $region53: #{tpu_custom_call.1} parent=47 // pred_check
          %p273 = pneg %p149
        $region54: #{tpu_custom_call.1} parent=47 // pred_check_branch
          %275 = sbr.rel (%p273) target = $region56
        $region55: #{tpu_custom_call.1} parent=47 // pred_region
          %276 = dma.done [#allocation6], 4096
        $region56: #{tpu_custom_call.1} parent=47 // pred_fallthru
          _
        %s277 = smul.u32 2, %s23
        %p278 = scmp.lt.s32.totalorder %s277, 7
        %s279 = scalar_select %p278, %s277, 7
        %s280 = smul.addr %s279, 8
        %s281 = scalar_lea.vmem %s0, %s280
        %p282 = pneg %p44
        %p283 = pneg %p41
        %p284 = pneg %p65
        %p285 = pneg %p62
        %p286 = pneg %p86
        %p287 = pneg %p83
        %p288 = pneg %p107
        %p289 = pneg %p104
        %p290 = pneg %p128
        %p291 = pneg %p125
        %p292 = pneg %p149
        %p293 = pneg %p146
        %p294 = pneg %p170
        %p295 = pneg %p167
        %p296 = pneg %p196
        %p297 = pneg %p193
        %s298 = sand.u32 %s183, 1
        %s299 = scalar_lea.sflag [#allocation4], %s298
        %s300 = sand.u32 %s183, 1
        %s301 = smul.addr %s300, 16
        %s302 = scalar_lea.vmem [#allocation7], %s301
        %s303 = smul.u32 2, %s23
        %p304 = scmp.lt.s32.totalorder %s303, 7
        %s305 = scalar_select %p304, %s303, 7
        %s306 = smul.addr %s305, 8
        %s307 = scalar_lea.vmem %s0, %s306
        %s308 = smul.u32 2, %s23
        %s309 = smul.u32 2, %s23
        %v310 = vld [vmem:[%s307] sm:$0xff]
        %v311 = vld [vmem:[%s307 + $0x8] sm:$0xff]
        %v312 = vld [vmem:[%s1] sm:$0xff]
        %v313 = vld [vmem:[%s2] sm:$0x1]
        %v315 = vlaneseq
        %v316 = vshrl.u32 %v315, 7
        %v317 = vsub.s32 0, %v316
        %v318 = vrot.slane %v313, %v317
        %vm320 = vcmask 64512
        %v322 = vsel %vm320, %v310, 0
        %v325 = vsel %vm320, %v311, 0
        %327 = vmatprep.subr.mxu0 0.0
        %328 = vmatpush1.msra.mxu0 0.0
        %329 = vmatprep.subr.mxu0 0.0
        %330 = vmatpush1.msra.mxu0 0.0
        %331 = vmatprep.subr.mxu0 0.0
        %332 = vmatpush1.msra.mxu0 0.0
        %333 = vmatprep.subr.mxu0 0.0
        %334 = vmatpush1.msra.mxu0 0.0
        %335 = vmatprep.subr.mxu0 0.0
        %336 = vmatpush1.msra.mxu0 0.0
        %337 = vmatprep.subr.mxu0 0.0
        %338 = vmatpush1.msra.mxu0 0.0
        %339 = vmatprep.subr.mxu0 0.0
        %340 = vmatpush1.msra.mxu0 0.0
        %341 = vmatprep.subr.mxu0 0.0
        %342 = vmatpush1.msra.mxu0 0.0
        %343 = vmatprep.subr.mxu0 0.0
        %344 = vmatpush1.msra.mxu0 0.0
        %345 = vmatprep.subr.mxu0 0.0
        %346 = vmatpush1.msra.mxu0 0.0
        %347 = vmatprep.subr.mxu0 0.0
        %348 = vmatpush1.msra.mxu0 0.0
        %349 = vmatprep.subr.mxu0 0.0
        %350 = vmatpush1.msra.mxu0 0.0
        %351 = vmatprep.subr.mxu0 0.0
        %352 = vmatpush1.msra.mxu0 0.0
        %353 = vmatprep.subr.mxu0 0.0
        %354 = vmatpush1.msra.mxu0 0.0
        %355 = vmatprep.subr.mxu0 0.0
        %356 = vmatpush1.msra.mxu0 0.0
        %357 = vmatprep.subr.mxu0 0.0
        %358 = vmatpush1.msra.mxu0 %v312
        %359 = vmatprep.subr.mxu0 0.0
        %360 = vmatpush2.msra.mxu0 0.0
        %361 = vmatprep.subr.mxu0 0.0
        %362 = vmatpush2.msra.mxu0 0.0
        %363 = vmatprep.subr.mxu0 0.0
        %364 = vmatpush2.msra.mxu0 0.0
        %365 = vmatprep.subr.mxu0 0.0
        %366 = vmatpush2.msra.mxu0 0.0
        %367 = vmatprep.subr.mxu0 0.0
        %368 = vmatpush2.msra.mxu0 0.0
        %369 = vmatprep.subr.mxu0 0.0
        %370 = vmatpush2.msra.mxu0 0.0
        %371 = vmatprep.subr.mxu0 0.0
        %372 = vmatpush2.msra.mxu0 0.0
        %373 = vmatprep.subr.mxu0 0.0
        %374 = vmatpush2.msra.mxu0 0.0
        %375 = vmatprep.subr.mxu0 0.0
        %376 = vmatpush2.msra.mxu0 0.0
        %377 = vmatprep.subr.mxu0 0.0
        %378 = vmatpush2.msra.mxu0 0.0
        %379 = vmatprep.subr.mxu0 0.0
        %380 = vmatpush2.msra.mxu0 0.0
        %381 = vmatprep.subr.mxu0 0.0
        %382 = vmatpush2.msra.mxu0 0.0
        %383 = vmatprep.subr.mxu0 0.0
        %384 = vmatpush2.msra.mxu0 0.0
        %385 = vmatprep.subr.mxu0 0.0
        %386 = vmatpush2.msra.mxu0 0.0
        %387 = vmatprep.subr.mxu0 0.0
        %388 = vmatpush2.msra.mxu0 0.0
        %389 = vmatprep.subr.mxu0 0.0
        %390 = vmatpush2.msra.mxu0 0.0
        %391 = vmatprep.mubr.f32.mxu0 0.0
        %392 = vmatmul.mubr.f32.gmra.mxu0 %v322
        %v393 = vpop.f32.mrf.mxu0
        %v394 = vadd.f32 %v318, %v393
        %v395 = vpop.f32.mrf.mxu0
        %396 = vmatprep.mubr.f32.mxu0 0.0
        %397 = vmatmul.mubr.f32.gmra.mxu0 %v325
        %v398 = vpop.f32.mrf.mxu0
        %v399 = vadd.f32 %v318, %v398
        %v400 = vpop.f32.mrf.mxu0
        %401 = vdwg.mxu0
        %v402 = vmax.f32 %v394, 0.0
        %v403 = vmax.f32 %v399, 0.0
        %v404 = vld [vmem:[#allocation2] sm:$0xff]
        %v405 = vld [vmem:[#allocation2 + $0x8] sm:$0xff]
        %v406 = vld [vmem:[#allocation2 + $0x10] sm:$0xff]
        %v407 = vld [vmem:[#allocation2 + $0x18] sm:$0xff]
        %v408 = vld [vmem:[#allocation2 + $0x20] sm:$0xff]
        %v409 = vld [vmem:[#allocation2 + $0x28] sm:$0xff]
        %v410 = vld [vmem:[#allocation2 + $0x30] sm:$0xff]
        %v411 = vld [vmem:[#allocation2 + $0x38] sm:$0xff]
        %v412 = vld [vmem:[#allocation2 + $0x40] sm:$0xff]
        %v413 = vld [vmem:[#allocation2 + $0x48] sm:$0xff]
        %v414 = vld [vmem:[#allocation2 + $0x50] sm:$0xff]
        %v415 = vld [vmem:[#allocation2 + $0x58] sm:$0xff]
        %v416 = vld [vmem:[#allocation2 + $0x60] sm:$0xff]
        %v417 = vld [vmem:[#allocation2 + $0x68] sm:$0xff]
        %v418 = vld [vmem:[#allocation2 + $0x70] sm:$0xff]
        %v419 = vld [vmem:[#allocation2 + $0x78] sm:$0xff]
        %v420 = vld [vmem:[#allocation2 + $0x80] sm:$0xff]
        %v421 = vld [vmem:[#allocation2 + $0x88] sm:$0xff]
        %v422 = vld [vmem:[#allocation2 + $0x90] sm:$0xff]
        %v423 = vld [vmem:[#allocation2 + $0x98] sm:$0xff]
        %v424 = vld [vmem:[#allocation2 + $0xa0] sm:$0xff]
        %v425 = vld [vmem:[#allocation2 + $0xa8] sm:$0xff]
        %v426 = vld [vmem:[#allocation2 + $0xb0] sm:$0xff]
        %v427 = vld [vmem:[#allocation2 + $0xb8] sm:$0xff]
        %v428 = vld [vmem:[#allocation2 + $0xc0] sm:$0xff]
        %v429 = vld [vmem:[#allocation2 + $0xc8] sm:$0xff]
        %v430 = vld [vmem:[#allocation2 + $0xd0] sm:$0xff]
        %v431 = vld [vmem:[#allocation2 + $0xd8] sm:$0xff]
        %v432 = vld [vmem:[#allocation2 + $0xe0] sm:$0xff]
        %v433 = vld [vmem:[#allocation2 + $0xe8] sm:$0xff]
        %v434 = vld [vmem:[#allocation2 + $0xf0] sm:$0xff]
        %v435 = vld [vmem:[#allocation2 + $0xf8] sm:$0xff]
        %v436 = vld [vmem:[%s4] sm:$0x3]
        %v438 = vlaneseq
        %v439 = vshrl.u32 %v438, 7
        %v440 = vsub.s32 0, %v439
        %v441 = vrot.slane %v436, %v440
        %v442 = vlaneseq
        %v443 = vshrl.u32 %v442, 7
        %v444 = vsub.s32 1, %v443
        %v445 = vrot.slane %v436, %v444
        %448 = vmatprep.subr.mxu0 %v435
        %449 = vmatpush1.msra.mxu0 %v434
        %450 = vmatprep.subr.mxu0 %v433
        %451 = vmatpush1.msra.mxu0 %v432
        %452 = vmatprep.subr.mxu0 %v431
        %453 = vmatpush1.msra.mxu0 %v430
        %454 = vmatprep.subr.mxu0 %v429
        %455 = vmatpush1.msra.mxu0 %v428
        %456 = vmatprep.subr.mxu0 %v427
        %457 = vmatpush1.msra.mxu0 %v426
        %458 = vmatprep.subr.mxu0 %v425
        %459 = vmatpush1.msra.mxu0 %v424
        %460 = vmatprep.subr.mxu0 %v423
        %461 = vmatpush1.msra.mxu0 %v422
        %462 = vmatprep.subr.mxu0 %v421
        %463 = vmatpush1.msra.mxu0 %v420
        %464 = vmatprep.subr.mxu0 %v419
        %465 = vmatpush1.msra.mxu0 %v418
        %466 = vmatprep.subr.mxu0 %v417
        %467 = vmatpush1.msra.mxu0 %v416
        %468 = vmatprep.subr.mxu0 %v415
        %469 = vmatpush1.msra.mxu0 %v414
        %470 = vmatprep.subr.mxu0 %v413
        %471 = vmatpush1.msra.mxu0 %v412
        %472 = vmatprep.subr.mxu0 %v411
        %473 = vmatpush1.msra.mxu0 %v410
        %474 = vmatprep.subr.mxu0 %v409
        %475 = vmatpush1.msra.mxu0 %v408
        %476 = vmatprep.subr.mxu0 %v407
        %477 = vmatpush1.msra.mxu0 %v406
        %478 = vmatprep.subr.mxu0 %v405
        %479 = vmatpush1.msra.mxu0 %v404
        %480 = vmatprep.subr.mxu0 0.0
        %481 = vmatpush2.msra.mxu0 0.0
        %482 = vmatprep.subr.mxu0 0.0
        %483 = vmatpush2.msra.mxu0 0.0
        %484 = vmatprep.subr.mxu0 0.0
        %485 = vmatpush2.msra.mxu0 0.0
        %486 = vmatprep.subr.mxu0 0.0
        %487 = vmatpush2.msra.mxu0 0.0
        %488 = vmatprep.subr.mxu0 0.0
        %489 = vmatpush2.msra.mxu0 0.0
        %490 = vmatprep.subr.mxu0 0.0
        %491 = vmatpush2.msra.mxu0 0.0
        %492 = vmatprep.subr.mxu0 0.0
        %493 = vmatpush2.msra.mxu0 0.0
        %494 = vmatprep.subr.mxu0 0.0
        %495 = vmatpush2.msra.mxu0 0.0
        %496 = vmatprep.subr.mxu0 0.0
        %497 = vmatpush2.msra.mxu0 0.0
        %498 = vmatprep.subr.mxu0 0.0
        %499 = vmatpush2.msra.mxu0 0.0
        %500 = vmatprep.subr.mxu0 0.0
        %501 = vmatpush2.msra.mxu0 0.0
        %502 = vmatprep.subr.mxu0 0.0
        %503 = vmatpush2.msra.mxu0 0.0
        %504 = vmatprep.subr.mxu0 0.0
        %505 = vmatpush2.msra.mxu0 0.0
        %506 = vmatprep.subr.mxu0 0.0
        %507 = vmatpush2.msra.mxu0 0.0
        %508 = vmatprep.subr.mxu0 0.0
        %509 = vmatpush2.msra.mxu0 0.0
        %510 = vmatprep.subr.mxu0 0.0
        %511 = vmatpush2.msra.mxu0 0.0
        %512 = vmatprep.mubr.f32.mxu0 0.0
        %513 = vmatmul.mubr.f32.gmra.mxu0 %v402
        %v514 = vpop.f32.mrf.mxu0
        %v515 = vadd.f32 %v441, %v514
        %v516 = vpop.f32.mrf.mxu0
        %v517 = vadd.f32 %v445, %v516
        %518 = vmatprep.mubr.f32.mxu0 0.0
        %519 = vmatmul.mubr.f32.gmra.mxu0 %v403
        %v520 = vpop.f32.mrf.mxu0
        %v521 = vadd.f32 %v441, %v520
        %v522 = vpop.f32.mrf.mxu0
        %v523 = vadd.f32 %v445, %v522
        %524 = vdwg.mxu0
        %v525 = vmax.f32 %v515, 0.0
        %v526 = vmax.f32 %v517, 0.0
        %v527 = vmax.f32 %v521, 0.0
        %v528 = vmax.f32 %v523, 0.0
        %v529 = vld [vmem:[#allocation5] sm:$0xff]
        %v530 = vld [vmem:[#allocation5 + $0x8] sm:$0xff]
        %v531 = vld [vmem:[#allocation5 + $0x10] sm:$0xff]
        %v532 = vld [vmem:[#allocation5 + $0x18] sm:$0xff]
        %v533 = vld [vmem:[#allocation5 + $0x20] sm:$0xff]
        %v534 = vld [vmem:[#allocation5 + $0x28] sm:$0xff]
        %v535 = vld [vmem:[#allocation5 + $0x30] sm:$0xff]
        %v536 = vld [vmem:[#allocation5 + $0x38] sm:$0xff]
        %v537 = vld [vmem:[#allocation5 + $0x40] sm:$0xff]
        %v538 = vld [vmem:[#allocation5 + $0x48] sm:$0xff]
        %v539 = vld [vmem:[#allocation5 + $0x50] sm:$0xff]
        %v540 = vld [vmem:[#allocation5 + $0x58] sm:$0xff]
        %v541 = vld [vmem:[#allocation5 + $0x60] sm:$0xff]
        %v542 = vld [vmem:[#allocation5 + $0x68] sm:$0xff]
        %v543 = vld [vmem:[#allocation5 + $0x70] sm:$0xff]
        %v544 = vld [vmem:[#allocation5 + $0x78] sm:$0xff]
        %v545 = vld [vmem:[#allocation5 + $0x80] sm:$0xff]
        %v546 = vld [vmem:[#allocation5 + $0x88] sm:$0xff]
        %v547 = vld [vmem:[#allocation5 + $0x90] sm:$0xff]
        %v548 = vld [vmem:[#allocation5 + $0x98] sm:$0xff]
        %v549 = vld [vmem:[#allocation5 + $0xa0] sm:$0xff]
        %v550 = vld [vmem:[#allocation5 + $0xa8] sm:$0xff]
        %v551 = vld [vmem:[#allocation5 + $0xb0] sm:$0xff]
        %v552 = vld [vmem:[#allocation5 + $0xb8] sm:$0xff]
        %v553 = vld [vmem:[#allocation5 + $0xc0] sm:$0xff]
        %v554 = vld [vmem:[#allocation5 + $0xc8] sm:$0xff]
        %v555 = vld [vmem:[#allocation5 + $0xd0] sm:$0xff]
        %v556 = vld [vmem:[#allocation5 + $0xd8] sm:$0xff]
        %v557 = vld [vmem:[#allocation5 + $0xe0] sm:$0xff]
        %v558 = vld [vmem:[#allocation5 + $0xe8] sm:$0xff]
        %v559 = vld [vmem:[#allocation5 + $0xf0] sm:$0xff]
        %v560 = vld [vmem:[#allocation5 + $0xf8] sm:$0xff]
        %v561 = vld [vmem:[%s6] sm:$0x1]
        %v563 = vlaneseq
        %v564 = vshrl.u32 %v563, 7
        %v565 = vsub.s32 0, %v564
        %v566 = vrot.slane %v561, %v565
        %568 = vmatprep.subr.mxu0 0.0
        %569 = vmatpush1.msra.mxu0 %v544
        %570 = vmatprep.subr.mxu0 0.0
        %571 = vmatpush1.msra.mxu0 %v543
        %572 = vmatprep.subr.mxu0 0.0
        %573 = vmatpush1.msra.mxu0 %v542
        %574 = vmatprep.subr.mxu0 0.0
        %575 = vmatpush1.msra.mxu0 %v541
        %576 = vmatprep.subr.mxu0 0.0
        %577 = vmatpush1.msra.mxu0 %v540
        %578 = vmatprep.subr.mxu0 0.0
        %579 = vmatpush1.msra.mxu0 %v539
        %580 = vmatprep.subr.mxu0 0.0
        %581 = vmatpush1.msra.mxu0 %v538
        %582 = vmatprep.subr.mxu0 0.0
        %583 = vmatpush1.msra.mxu0 %v537
        %584 = vmatprep.subr.mxu0 0.0
        %585 = vmatpush1.msra.mxu0 %v536
        %586 = vmatprep.subr.mxu0 0.0
        %587 = vmatpush1.msra.mxu0 %v535
        %588 = vmatprep.subr.mxu0 0.0
        %589 = vmatpush1.msra.mxu0 %v534
        %590 = vmatprep.subr.mxu0 0.0
        %591 = vmatpush1.msra.mxu0 %v533
        %592 = vmatprep.subr.mxu0 0.0
        %593 = vmatpush1.msra.mxu0 %v532
        %594 = vmatprep.subr.mxu0 0.0
        %595 = vmatpush1.msra.mxu0 %v531
        %596 = vmatprep.subr.mxu0 0.0
        %597 = vmatpush1.msra.mxu0 %v530
        %598 = vmatprep.subr.mxu0 0.0
        %599 = vmatpush1.msra.mxu0 %v529
        %600 = vmatprep.subr.mxu0 0.0
        %601 = vmatpush2.msra.mxu0 %v560
        %602 = vmatprep.subr.mxu0 0.0
        %603 = vmatpush2.msra.mxu0 %v559
        %604 = vmatprep.subr.mxu0 0.0
        %605 = vmatpush2.msra.mxu0 %v558
        %606 = vmatprep.subr.mxu0 0.0
        %607 = vmatpush2.msra.mxu0 %v557
        %608 = vmatprep.subr.mxu0 0.0
        %609 = vmatpush2.msra.mxu0 %v556
        %610 = vmatprep.subr.mxu0 0.0
        %611 = vmatpush2.msra.mxu0 %v555
        %612 = vmatprep.subr.mxu0 0.0
        %613 = vmatpush2.msra.mxu0 %v554
        %614 = vmatprep.subr.mxu0 0.0
        %615 = vmatpush2.msra.mxu0 %v553
        %616 = vmatprep.subr.mxu0 0.0
        %617 = vmatpush2.msra.mxu0 %v552
        %618 = vmatprep.subr.mxu0 0.0
        %619 = vmatpush2.msra.mxu0 %v551
        %620 = vmatprep.subr.mxu0 0.0
        %621 = vmatpush2.msra.mxu0 %v550
        %622 = vmatprep.subr.mxu0 0.0
        %623 = vmatpush2.msra.mxu0 %v549
        %624 = vmatprep.subr.mxu0 0.0
        %625 = vmatpush2.msra.mxu0 %v548
        %626 = vmatprep.subr.mxu0 0.0
        %627 = vmatpush2.msra.mxu0 %v547
        %628 = vmatprep.subr.mxu0 0.0
        %629 = vmatpush2.msra.mxu0 %v546
        %630 = vmatprep.subr.mxu0 0.0
        %631 = vmatpush2.msra.mxu0 %v545
        %632 = vmatprep.mubr.f32.mxu0 %v526
        %633 = vmatmul.mubr.f32.gmra.mxu0 %v525
        %v634 = vpop.f32.mrf.mxu0
        %v635 = vadd.f32 %v566, %v634
        %v636 = vpop.f32.mrf.mxu0
        %637 = vmatprep.mubr.f32.mxu0 %v528
        %638 = vmatmul.mubr.f32.gmra.mxu0 %v527
        %v639 = vpop.f32.mrf.mxu0
        %v640 = vadd.f32 %v566, %v639
        %v641 = vpop.f32.mrf.mxu0
        %642 = vdwg.mxu0
        %v643 = vlaneseq
        %v644 = vand.u32 %v643, 127
        %vm645 = vcmp.lt.s32.totalorder %v644, 4
        %v646 = vsel %vm645, %v635, -inf
        %v647 = vsel %vm645, %v640, -inf
        %648 = vmax.xlane.f32.xlu0 %v646
        %v649 = vpop.xlane.xlu0 %648
        %650 = vmax.xlane.f32.xlu0 %v647
        %v651 = vpop.xlane.xlu0 %650
        %v652 = vsub.f32 %v646, %v649
        %v653 = vsub.f32 %v647, %v651
        %v654 = vmul.f32 %v652, 1.442695
        %v655 = vpow.pop %v654
        %v656 = vmul.f32 %v653, 1.442695
        %v657 = vpow.pop %v656
        %658 = vadd.xlane.f32.xlu0 %v655
        %v659 = vpop.xlane.xlu0 %658
        %660 = vadd.xlane.f32.xlu0 %v657
        %v661 = vpop.xlane.xlu0 %660
        %v662 = vlog2.pop %v659
        %v663 = vmul.f32 %v662, 0.6931472
        %v664 = vlog2.pop %v661
        %v665 = vmul.f32 %v664, 0.6931472
        %v666 = vadd.f32 %v663, %v649
        %v667 = vadd.f32 %v665, %v651
        %v668 = vsel %vm645, %v666, 0.0
        %v669 = vsel %vm645, %v667, 0.0
        %v670 = vsub.f32 %v635, %v668
        %v671 = vsub.f32 %v640, %v669
        %672 = vst [vmem:[%s302] sm:$0xff] %v670
        %673 = vst [vmem:[%s302 + $0x8] sm:$0xff] %v671
        %s674 = sand.u32 %s183, 1
        %s675 = scalar_lea.sflag [#allocation4], %s674
        %s676 = sand.u32 %s183, 1
        %s677 = smul.addr %s676, 16
        %s678 = scalar_lea.vmem [#allocation7], %s677
        // Predicated region
        $region57: #{tpu_custom_call.1} parent=47 // pred_check
          %p679 = pneg %p193
        $region58: #{tpu_custom_call.1} parent=47 // pred_check_branch
          %681 = sbr.rel (%p679) target = $region60
        $region59: #{tpu_custom_call.1} parent=47 // pred_region
          %s682 = smul.u32 2, %s23
          %s684 = ssub.s32 256, 256
          %685 = vsyncadd %s675, %s684
          %s686 = smul.addr %s682, 128
          %s687 = scalar_lea.hbm %s7, %s686
          %s688 = sshll.u32 %s678, 4
          %s689 = int_to_ptr.vmem [resolvable:$true] %s688
          %694 = dma.vmem_to_hbm [thread:$0]  %s689, 256, %s687, %s675, 128, 128, 8
        $region60: #{tpu_custom_call.1} parent=47 // pred_fallthru
          _
      $region48: #{tpu_custom_call.1} parent=5 // pred_fallthru
        _
      %p695 = scmp.le.s32.totalorder 2, %s18
      // Predicated region
      $region61: #{tpu_custom_call.1} parent=5 // pred_check
        %p696 = pneg %p695
      $region62: #{tpu_custom_call.1} parent=5 // pred_check_branch
        %698 = sbr.rel (%p696) target = $region64
      $region63: #{tpu_custom_call.1} parent=5 // pred_region
        %s699 = ssub.s32 %s18, 2
        // Predicated region
        $region65: #{tpu_custom_call.1} parent=63 // pred_check
          %p700 = pneg %p199
        $region66: #{tpu_custom_call.1} parent=63 // pred_check_branch
          %702 = sbr.rel (%p700) target = $region68
        $region67: #{tpu_custom_call.1} parent=63 // pred_region
          %s703 = sand.u32 %s184, 1
          %s704 = scalar_lea.sflag [#allocation4], %s703
          %s705 = sand.u32 %s184, 1
          %s706 = smul.addr %s705, 16
          %s707 = scalar_lea.vmem [#allocation7], %s706
          %708 = dma.done %s704, 256
        $region68: #{tpu_custom_call.1} parent=63 // pred_fallthru
          _
      $region64: #{tpu_custom_call.1} parent=5 // pred_fallthru
        _
    $region6: #{tpu_custom_call.1} parent=1 // loop_footer
      %s22 = sadd.s32 1, %s18
    $region7: #{tpu_custom_call.1} parent=1 // loop_footer_branch
      %17 = sbr.rel target = $region3
    $region8: #{tpu_custom_call.1} parent=1 // loop_exit
      _
    %709 = vsyncpa [#allocation3], 1
    %s710 = scalar_lea.sflag [#allocation3], 1
    %711 = vsyncpa %s710, 1
    %712 = vsyncpa [#allocation6], 1
    %713 = vsyncpa [#allocation4], 1
    %s714 = scalar_lea.sflag [#allocation4], 1
    %715 = vsyncpa %s714, 1

</llo_original>
